<compile_context>
chip_gen: v7x
topology: tpu7x:2x2x1
jax: 0.10.0
libtpu: 0.0.40
codegen_flags: <defaults>
</compile_context>

<pallas_src>
import jax
import jax.numpy as jnp
from jax.experimental import pallas as pl
from jax.experimental.pallas import tpu as pltpu


def _round_up(x, m):
    return ((x + m - 1) // m) * m


def _largest_aligned_divisor(total, cap):
    """Largest multiple of 128 that divides `total` (itself a multiple of 128)
    and is <= cap (falls back to 128)."""
    m = total // 128
    best = 1
    for d in range(1, m + 1):
        if m % d == 0 and 128 * d <= cap:
            best = d
    return 128 * best


def _make_vpu_kernel(Bt, Cin, Cout):
    # Unrolled per-channel FMA contraction on the VPU. Weights/bias are
    # scalars in SMEM; each x channel row is a lane-dense (Bt, ts) slab.
    def kernel(x_ref, w_ref, b_ref, o_ref):
        for o in range(Cout):
            acc = x_ref[:, 0, :] * w_ref[o, 0]
            for c in range(1, Cin):
                acc = acc + x_ref[:, c, :] * w_ref[o, c]
            o_ref[:, o, :] = (acc + b_ref[o]).astype(o_ref.dtype)
    return kernel


def _make_mxu_kernel(Bt):
    # MXU contraction: out[b] = W(Cout,Cin) @ x[b](Cin, ts) + bias.
    def kernel(x_ref, w_ref, b_ref, o_ref):
        for b in range(Bt):
            y = jnp.dot(w_ref[...], x_ref[b],
                        preferred_element_type=jnp.float32)
            o_ref[b] = (y + b_ref[...]).astype(o_ref.dtype)
    return kernel


def b_forward(x_nchw, conv_w, conv_b, gamma, beta, running_mean, running_var,
              eps=1e-5):
    """Forward pass of module B. x_nchw: (N, Cin, H, W) -> (N, Cout, H, W)."""
    N, Cin, H, W = x_nchw.shape
    Cout = conv_w.shape[0]
    HW = H * W

    # Fold eval-mode BN into the conv: w <- w*scale, bias <- beta+(b-mean)*scale.
    inv_std = 1.0 / jnp.sqrt(running_var.astype(jnp.float32) + eps)
    scale = gamma.astype(jnp.float32) * inv_std                         # (Cout,)
    w = conv_w.reshape(Cout, Cin).astype(jnp.float32) * scale[:, None]  # (Cout,Cin)
    bias = beta.astype(jnp.float32) + (
        conv_b.astype(jnp.float32) - running_mean.astype(jnp.float32)) * scale

    # Free reshape: NCHW -> (N, Cin, H*W).
    x3d = x_nchw.reshape(N, Cin, HW)

    # Pad spatial only to the 128-lane requirement (often a no-op).
    HW_pad = _round_up(HW, 128)
    if HW_pad != HW:
        x3d = jnp.pad(x3d, ((0, 0), (0, 0), (0, HW_pad - HW)))

    # --- Tile selection (VMEM-budget driven, safe on v7x's 64 MiB) -----------
    TOTAL_VMEM_BUDGET = 40 << 20
    w_bytes = 4 * Cout * Cin
    pipe_budget = max(4 << 20, TOTAL_VMEM_BUDGET - 2 * w_bytes)
    # 8 = (x block + out block) * double buffering * 4 B, per batch row per lane.
    ts_cap = max(128, min(pipe_budget // (8 * (Cin + Cout)), 65536))
    ts = _largest_aligned_divisor(HW_pad, ts_cap)
    spatial_steps = HW_pad // ts

    # Keep >= 2 grid steps when possible so both v7x TensorCores get work.
    if N == 1 and spatial_steps == 1 and HW_pad >= 256:
        ts = _largest_aligned_divisor(HW_pad, HW_pad // 2)
        spatial_steps = HW_pad // ts

    # Batch blocking: amortize the ~0.35us/step pipeline overhead when the
    # spatial grid is small, without collapsing the grid below 2 steps.
    per_row_bytes = 8 * (Cin + Cout) * ts   # x+out blocks, double-buffered
    Bt = 1
    for bt in range(2, N + 1):
        if N % bt:
            continue
        if bt * per_row_bytes > pipe_budget:
            break
        if (N // bt) * spatial_steps < 2 and N * spatial_steps >= 2:
            break
        Bt = bt

    grid = (N // Bt, spatial_steps)

    # --- Kernel / specs ------------------------------------------------------
    small_channels = Cin <= 16 and Cout <= 16
    if small_channels:
        kernel = _make_vpu_kernel(Bt, Cin, Cout)
        w_arg, b_arg = w, bias
        w_spec = pl.BlockSpec(memory_space=pltpu.MemorySpace.SMEM)
        b_spec = pl.BlockSpec(memory_space=pltpu.MemorySpace.SMEM)
    else:
        kernel = _make_mxu_kernel(Bt)
        w_arg, b_arg = w, bias.reshape(Cout, 1)
        w_spec = pl.BlockSpec((Cout, Cin), lambda b, s: (0, 0))
        b_spec = pl.BlockSpec((Cout, 1), lambda b, s: (0, 0))

    x_blk_bytes = 4 * Bt * Cin * ts
    o_blk_bytes = 4 * Bt * Cout * ts
    vmem_needed = 2 * (x_blk_bytes + o_blk_bytes) + 2 * (w_bytes + 4 * Cout) + (4 << 20)
    vmem_limit = int(min(max(vmem_needed, 32 << 20), 48 << 20))

    cost = pl.CostEstimate(
        flops=2 * N * Cout * Cin * HW_pad,
        transcendentals=0,
        bytes_accessed=4 * (N * Cin * HW_pad + N * Cout * HW_pad
                            + Cout * Cin + Cout))

    out3d = pl.pallas_call(
        kernel,
        out_shape=jax.ShapeDtypeStruct((N, Cout, HW_pad), jnp.float32),
        grid_spec=pltpu.PrefetchScalarGridSpec(
            num_scalar_prefetch=0,
            grid=grid,
            in_specs=[
                pl.BlockSpec((Bt, Cin, ts), lambda b, s: (b, 0, s)),
                w_spec,
                b_spec,
            ],
            out_specs=pl.BlockSpec((Bt, Cout, ts), lambda b, s: (b, 0, s)),
        ),
        compiler_params=pltpu.CompilerParams(
            dimension_semantics=("parallel", "parallel"),
            vmem_limit_bytes=vmem_limit),
        cost_estimate=cost,
    )(x3d, w_arg, b_arg)

    if HW_pad != HW:
        out3d = out3d[:, :, :HW]
    return out3d.reshape(N, Cout, H, W)


def _reference(x_nchw, conv_w, conv_b, gamma, beta, running_mean, running_var,
               eps=1e-5):
    # Pure-JAX reference: 1x1 conv as einsum (full f32 precision) + eval-mode BN.
    y = jnp.einsum('nchw,oc->nohw', x_nchw,
                   conv_w.reshape(conv_w.shape[0], -1),
                   precision=jax.lax.Precision.HIGHEST)
    y = y + conv_b[None, :, None, None]
    y = (y - running_mean[None, :, None, None]) / jnp.sqrt(
        running_var[None, :, None, None] + eps)
    return y * gamma[None, :, None, None] + beta[None, :, None, None]


if __name__ == "__main__":
    def make_case(key, N, Cin, Cout, H, W):
        kx, kw, kb, kg, kbe, km, kv = jax.random.split(key, 7)
        x = jax.random.normal(kx, (N, Cin, H, W), dtype=jnp.float32)
        conv_w = jax.random.normal(kw, (Cout, Cin, 1, 1), dtype=jnp.float32) * 0.1
        conv_b = jax.random.normal(kb, (Cout,), dtype=jnp.float32) * 0.1
        gamma = 1.0 + 0.1 * jax.random.normal(kg, (Cout,), dtype=jnp.float32)
        beta = 0.1 * jax.random.normal(kbe, (Cout,), dtype=jnp.float32)
        rmean = 0.1 * jax.random.normal(km, (Cout,), dtype=jnp.float32)
        rvar = jnp.abs(1.0 + 0.1 * jax.random.normal(kv, (Cout,), dtype=jnp.float32))
        return (x, conv_w, conv_b, gamma, beta, rmean, rvar)

    key = jax.random.PRNGKey(0)
    k1, k2 = jax.random.split(key)

    # Case 1: small-channel regime (VPU contraction path), HW % 128 == 0.
    args1 = make_case(k1, N=2, Cin=4, Cout=8, H=16, W=16)
    out1 = jax.block_until_ready(b_forward(*args1))
    ref1 = _reference(*args1)
    assert out1.shape == (2, 8, 16, 16)
    assert jnp.allclose(out1, ref1, atol=1e-4, rtol=1e-4), float(
        jnp.max(jnp.abs(out1 - ref1)))

    # Case 2: MXU path, spatial padding (HW=64 -> 128 lanes), odd batch.
    args2 = make_case(k2, N=3, Cin=32, Cout=24, H=8, W=8)
    out2 = jax.block_until_ready(b_forward(*args2))
    ref2 = _reference(*args2)
    assert out2.shape == (3, 24, 8, 8)
    # MXU dot at default precision rounds operands to bf16 -> ~1e-3 abs error.
    assert jnp.allclose(out2, ref2, atol=1e-2, rtol=1e-2), float(
        jnp.max(jnp.abs(out2 - ref2)))

    print("KERNEL_OK")
</pallas_src>

<mosaic_0001>
module attributes {stable_mosaic.version = 11 : i64} {
  func.func @kernel(%arg0: i32, %arg1: i32, %arg2: memref<1x4x256xf32, #tpu.memory_space<vmem>>, %arg3: memref<8x4xf32, #tpu.memory_space<smem>>, %arg4: memref<8xf32, #tpu.memory_space<smem>>, %arg5: memref<1x8x256xf32, #tpu.memory_space<vmem>>) attributes {dimension_semantics = [#tpu.dimension_semantics<parallel>, #tpu.dimension_semantics<parallel>], iteration_bounds = array<i64: 2, 1>, scalar_prefetch = 0 : i64, scratch_operands = 0 : i64, tpu.core_type = #tpu.core_type<tc>, window_params = [{transform_indices = @transform_0, window_bounds = array<i64: 1, 4, 256>}, {transform_indices = @transform_1, window_bounds = array<i64: 8, 4>}, {transform_indices = @transform_2, window_bounds = array<i64: 8>}, {transform_indices = @transform_3, window_bounds = array<i64: 1, 8, 256>}]} {
    %c0 = arith.constant 0 : index
    %c0_0 = arith.constant 0 : index
    %c0_1 = arith.constant 0 : index
    %0 = vector.load %arg2[%c0, %c0_0, %c0_1] : memref<1x4x256xf32, #tpu.memory_space<vmem>>, vector<1x1x256xf32>
    %1 = vector.shape_cast %0 : vector<1x1x256xf32> to vector<1x256xf32>
    %c0_2 = arith.constant 0 : index
    %c0_3 = arith.constant 0 : index
    %2 = memref.load %arg3[%c0_2, %c0_3] : memref<8x4xf32, #tpu.memory_space<smem>>
    %3 = vector.broadcast %2 : f32 to vector<1x256xf32>
    %4 = arith.mulf %1, %3 : vector<1x256xf32>
    %c0_4 = arith.constant 0 : index
    %c1 = arith.constant 1 : index
    %c0_5 = arith.constant 0 : index
    %5 = vector.load %arg2[%c0_4, %c1, %c0_5] : memref<1x4x256xf32, #tpu.memory_space<vmem>>, vector<1x1x256xf32>
    %6 = vector.shape_cast %5 : vector<1x1x256xf32> to vector<1x256xf32>
    %c0_6 = arith.constant 0 : index
    %c1_7 = arith.constant 1 : index
    %7 = memref.load %arg3[%c0_6, %c1_7] : memref<8x4xf32, #tpu.memory_space<smem>>
    %8 = vector.broadcast %7 : f32 to vector<1x256xf32>
    %9 = arith.mulf %6, %8 : vector<1x256xf32>
    %10 = arith.addf %4, %9 : vector<1x256xf32>
    %c0_8 = arith.constant 0 : index
    %c2 = arith.constant 2 : index
    %c0_9 = arith.constant 0 : index
    %11 = vector.load %arg2[%c0_8, %c2, %c0_9] : memref<1x4x256xf32, #tpu.memory_space<vmem>>, vector<1x1x256xf32>
    %12 = vector.shape_cast %11 : vector<1x1x256xf32> to vector<1x256xf32>
    %c0_10 = arith.constant 0 : index
    %c2_11 = arith.constant 2 : index
    %13 = memref.load %arg3[%c0_10, %c2_11] : memref<8x4xf32, #tpu.memory_space<smem>>
    %14 = vector.broadcast %13 : f32 to vector<1x256xf32>
    %15 = arith.mulf %12, %14 : vector<1x256xf32>
    %16 = arith.addf %10, %15 : vector<1x256xf32>
    %c0_12 = arith.constant 0 : index
    %c3 = arith.constant 3 : index
    %c0_13 = arith.constant 0 : index
    %17 = vector.load %arg2[%c0_12, %c3, %c0_13] : memref<1x4x256xf32, #tpu.memory_space<vmem>>, vector<1x1x256xf32>
    %18 = vector.shape_cast %17 : vector<1x1x256xf32> to vector<1x256xf32>
    %c0_14 = arith.constant 0 : index
    %c3_15 = arith.constant 3 : index
    %19 = memref.load %arg3[%c0_14, %c3_15] : memref<8x4xf32, #tpu.memory_space<smem>>
    %20 = vector.broadcast %19 : f32 to vector<1x256xf32>
    %21 = arith.mulf %18, %20 : vector<1x256xf32>
    %22 = arith.addf %16, %21 : vector<1x256xf32>
    %c0_16 = arith.constant 0 : index
    %23 = memref.load %arg4[%c0_16] : memref<8xf32, #tpu.memory_space<smem>>
    %24 = vector.broadcast %23 : f32 to vector<1x256xf32>
    %25 = arith.addf %22, %24 : vector<1x256xf32>
    %c0_17 = arith.constant 0 : index
    %c0_18 = arith.constant 0 : index
    %c0_19 = arith.constant 0 : index
    %26 = vector.load %arg5[%c0_17, %c0_18, %c0_19] : memref<1x8x256xf32, #tpu.memory_space<vmem>>, vector<1x1x256xf32>
    %27 = vector.shape_cast %26 : vector<1x1x256xf32> to vector<1x256xf32>
    %28 = vector.shape_cast %25 : vector<1x256xf32> to vector<1x1x256xf32>
    tpu.vector_store %arg5[%c0_17, %c0_18, %c0_19], %28 {strides = array<i32>} : memref<1x8x256xf32, #tpu.memory_space<vmem>>, vector<1x1x256xf32>,
    %c0_20 = arith.constant 0 : index
    %c0_21 = arith.constant 0 : index
    %c0_22 = arith.constant 0 : index
    %29 = vector.load %arg2[%c0_20, %c0_21, %c0_22] : memref<1x4x256xf32, #tpu.memory_space<vmem>>, vector<1x1x256xf32>
    %30 = vector.shape_cast %29 : vector<1x1x256xf32> to vector<1x256xf32>
    %c1_23 = arith.constant 1 : index
    %c0_24 = arith.constant 0 : index
    %31 = memref.load %arg3[%c1_23, %c0_24] : memref<8x4xf32, #tpu.memory_space<smem>>
    %32 = vector.broadcast %31 : f32 to vector<1x256xf32>
    %33 = arith.mulf %30, %32 : vector<1x256xf32>
    %c0_25 = arith.constant 0 : index
    %c1_26 = arith.constant 1 : index
    %c0_27 = arith.constant 0 : index
    %34 = vector.load %arg2[%c0_25, %c1_26, %c0_27] : memref<1x4x256xf32, #tpu.memory_space<vmem>>, vector<1x1x256xf32>
    %35 = vector.shape_cast %34 : vector<1x1x256xf32> to vector<1x256xf32>
    %c1_28 = arith.constant 1 : index
    %c1_29 = arith.constant 1 : index
    %36 = memref.load %arg3[%c1_28, %c1_29] : memref<8x4xf32, #tpu.memory_space<smem>>
    %37 = vector.broadcast %36 : f32 to vector<1x256xf32>
    %38 = arith.mulf %35, %37 : vector<1x256xf32>
    %39 = arith.addf %33, %38 : vector<1x256xf32>
    %c0_30 = arith.constant 0 : index
    %c2_31 = arith.constant 2 : index
    %c0_32 = arith.constant 0 : index
    %40 = vector.load %arg2[%c0_30, %c2_31, %c0_32] : memref<1x4x256xf32, #tpu.memory_space<vmem>>, vector<1x1x256xf32>
    %41 = vector.shape_cast %40 : vector<1x1x256xf32> to vector<1x256xf32>
    %c1_33 = arith.constant 1 : index
    %c2_34 = arith.constant 2 : index
    %42 = memref.load %arg3[%c1_33, %c2_34] : memref<8x4xf32, #tpu.memory_space<smem>>
    %43 = vector.broadcast %42 : f32 to vector<1x256xf32>
    %44 = arith.mulf %41, %43 : vector<1x256xf32>
    %45 = arith.addf %39, %44 : vector<1x256xf32>
    %c0_35 = arith.constant 0 : index
    %c3_36 = arith.constant 3 : index
    %c0_37 = arith.constant 0 : index
    %46 = vector.load %arg2[%c0_35, %c3_36, %c0_37] : memref<1x4x256xf32, #tpu.memory_space<vmem>>, vector<1x1x256xf32>
    %47 = vector.shape_cast %46 : vector<1x1x256xf32> to vector<1x256xf32>
    %c1_38 = arith.constant 1 : index
    %c3_39 = arith.constant 3 : index
    %48 = memref.load %arg3[%c1_38, %c3_39] : memref<8x4xf32, #tpu.memory_space<smem>>
    %49 = vector.broadcast %48 : f32 to vector<1x256xf32>
    %50 = arith.mulf %47, %49 : vector<1x256xf32>
    %51 = arith.addf %45, %50 : vector<1x256xf32>
    %c1_40 = arith.constant 1 : index
    %52 = memref.load %arg4[%c1_40] : memref<8xf32, #tpu.memory_space<smem>>
    %53 = vector.broadcast %52 : f32 to vector<1x256xf32>
    %54 = arith.addf %51, %53 : vector<1x256xf32>
    %c0_41 = arith.constant 0 : index
    %c1_42 = arith.constant 1 : index
    %c0_43 = arith.constant 0 : index
    %55 = vector.load %arg5[%c0_41, %c1_42, %c0_43] : memref<1x8x256xf32, #tpu.memory_space<vmem>>, vector<1x1x256xf32>
    %56 = vector.shape_cast %55 : vector<1x1x256xf32> to vector<1x256xf32>
    %57 = vector.shape_cast %54 : vector<1x256xf32> to vector<1x1x256xf32>
    tpu.vector_store %arg5[%c0_41, %c1_42, %c0_43], %57 {strides = array<i32>} : memref<1x8x256xf32, #tpu.memory_space<vmem>>, vector<1x1x256xf32>,
    %c0_44 = arith.constant 0 : index
    %c0_45 = arith.constant 0 : index
    %c0_46 = arith.constant 0 : index
    %58 = vector.load %arg2[%c0_44, %c0_45, %c0_46] : memref<1x4x256xf32, #tpu.memory_space<vmem>>, vector<1x1x256xf32>
    %59 = vector.shape_cast %58 : vector<1x1x256xf32> to vector<1x256xf32>
    %c2_47 = arith.constant 2 : index
    %c0_48 = arith.constant 0 : index
    %60 = memref.load %arg3[%c2_47, %c0_48] : memref<8x4xf32, #tpu.memory_space<smem>>
    %61 = vector.broadcast %60 : f32 to vector<1x256xf32>
    %62 = arith.mulf %59, %61 : vector<1x256xf32>
    %c0_49 = arith.constant 0 : index
    %c1_50 = arith.constant 1 : index
    %c0_51 = arith.constant 0 : index
    %63 = vector.load %arg2[%c0_49, %c1_50, %c0_51] : memref<1x4x256xf32, #tpu.memory_space<vmem>>, vector<1x1x256xf32>
    %64 = vector.shape_cast %63 : vector<1x1x256xf32> to vector<1x256xf32>
    %c2_52 = arith.constant 2 : index
    %c1_53 = arith.constant 1 : index
    %65 = memref.load %arg3[%c2_52, %c1_53] : memref<8x4xf32, #tpu.memory_space<smem>>
    %66 = vector.broadcast %65 : f32 to vector<1x256xf32>
    %67 = arith.mulf %64, %66 : vector<1x256xf32>
    %68 = arith.addf %62, %67 : vector<1x256xf32>
    %c0_54 = arith.constant 0 : index
    %c2_55 = arith.constant 2 : index
    %c0_56 = arith.constant 0 : index
    %69 = vector.load %arg2[%c0_54, %c2_55, %c0_56] : memref<1x4x256xf32, #tpu.memory_space<vmem>>, vector<1x1x256xf32>
    %70 = vector.shape_cast %69 : vector<1x1x256xf32> to vector<1x256xf32>
    %c2_57 = arith.constant 2 : index
    %c2_58 = arith.constant 2 : index
    %71 = memref.load %arg3[%c2_57, %c2_58] : memref<8x4xf32, #tpu.memory_space<smem>>
    %72 = vector.broadcast %71 : f32 to vector<1x256xf32>
    %73 = arith.mulf %70, %72 : vector<1x256xf32>
    %74 = arith.addf %68, %73 : vector<1x256xf32>
    %c0_59 = arith.constant 0 : index
    %c3_60 = arith.constant 3 : index
    %c0_61 = arith.constant 0 : index
    %75 = vector.load %arg2[%c0_59, %c3_60, %c0_61] : memref<1x4x256xf32, #tpu.memory_space<vmem>>, vector<1x1x256xf32>
    %76 = vector.shape_cast %75 : vector<1x1x256xf32> to vector<1x256xf32>
    %c2_62 = arith.constant 2 : index
    %c3_63 = arith.constant 3 : index
    %77 = memref.load %arg3[%c2_62, %c3_63] : memref<8x4xf32, #tpu.memory_space<smem>>
    %78 = vector.broadcast %77 : f32 to vector<1x256xf32>
    %79 = arith.mulf %76, %78 : vector<1x256xf32>
    %80 = arith.addf %74, %79 : vector<1x256xf32>
    %c2_64 = arith.constant 2 : index
    %81 = memref.load %arg4[%c2_64] : memref<8xf32, #tpu.memory_space<smem>>
    %82 = vector.broadcast %81 : f32 to vector<1x256xf32>
    %83 = arith.addf %80, %82 : vector<1x256xf32>
    %c0_65 = arith.constant 0 : index
    %c2_66 = arith.constant 2 : index
    %c0_67 = arith.constant 0 : index
    %84 = vector.load %arg5[%c0_65, %c2_66, %c0_67] : memref<1x8x256xf32, #tpu.memory_space<vmem>>, vector<1x1x256xf32>
    %85 = vector.shape_cast %84 : vector<1x1x256xf32> to vector<1x256xf32>
    %86 = vector.shape_cast %83 : vector<1x256xf32> to vector<1x1x256xf32>
    tpu.vector_store %arg5[%c0_65, %c2_66, %c0_67], %86 {strides = array<i32>} : memref<1x8x256xf32, #tpu.memory_space<vmem>>, vector<1x1x256xf32>,
    %c0_68 = arith.constant 0 : index
    %c0_69 = arith.constant 0 : index
    %c0_70 = arith.constant 0 : index
    %87 = vector.load %arg2[%c0_68, %c0_69, %c0_70] : memref<1x4x256xf32, #tpu.memory_space<vmem>>, vector<1x1x256xf32>
    %88 = vector.shape_cast %87 : vector<1x1x256xf32> to vector<1x256xf32>
    %c3_71 = arith.constant 3 : index
    %c0_72 = arith.constant 0 : index
    %89 = memref.load %arg3[%c3_71, %c0_72] : memref<8x4xf32, #tpu.memory_space<smem>>
    %90 = vector.broadcast %89 : f32 to vector<1x256xf32>
    %91 = arith.mulf %88, %90 : vector<1x256xf32>
    %c0_73 = arith.constant 0 : index
    %c1_74 = arith.constant 1 : index
    %c0_75 = arith.constant 0 : index
    %92 = vector.load %arg2[%c0_73, %c1_74, %c0_75] : memref<1x4x256xf32, #tpu.memory_space<vmem>>, vector<1x1x256xf32>
    %93 = vector.shape_cast %92 : vector<1x1x256xf32> to vector<1x256xf32>
    %c3_76 = arith.constant 3 : index
    %c1_77 = arith.constant 1 : index
    %94 = memref.load %arg3[%c3_76, %c1_77] : memref<8x4xf32, #tpu.memory_space<smem>>
    %95 = vector.broadcast %94 : f32 to vector<1x256xf32>
    %96 = arith.mulf %93, %95 : vector<1x256xf32>
    %97 = arith.addf %91, %96 : vector<1x256xf32>
    %c0_78 = arith.constant 0 : index
    %c2_79 = arith.constant 2 : index
    %c0_80 = arith.constant 0 : index
    %98 = vector.load %arg2[%c0_78, %c2_79, %c0_80] : memref<1x4x256xf32, #tpu.memory_space<vmem>>, vector<1x1x256xf32>
    %99 = vector.shape_cast %98 : vector<1x1x256xf32> to vector<1x256xf32>
    %c3_81 = arith.constant 3 : index
    %c2_82 = arith.constant 2 : index
    %100 = memref.load %arg3[%c3_81, %c2_82] : memref<8x4xf32, #tpu.memory_space<smem>>
    %101 = vector.broadcast %100 : f32 to vector<1x256xf32>
    %102 = arith.mulf %99, %101 : vector<1x256xf32>
    %103 = arith.addf %97, %102 : vector<1x256xf32>
    %c0_83 = arith.constant 0 : index
    %c3_84 = arith.constant 3 : index
    %c0_85 = arith.constant 0 : index
    %104 = vector.load %arg2[%c0_83, %c3_84, %c0_85] : memref<1x4x256xf32, #tpu.memory_space<vmem>>, vector<1x1x256xf32>
    %105 = vector.shape_cast %104 : vector<1x1x256xf32> to vector<1x256xf32>
    %c3_86 = arith.constant 3 : index
    %c3_87 = arith.constant 3 : index
    %106 = memref.load %arg3[%c3_86, %c3_87] : memref<8x4xf32, #tpu.memory_space<smem>>
    %107 = vector.broadcast %106 : f32 to vector<1x256xf32>
    %108 = arith.mulf %105, %107 : vector<1x256xf32>
    %109 = arith.addf %103, %108 : vector<1x256xf32>
    %c3_88 = arith.constant 3 : index
    %110 = memref.load %arg4[%c3_88] : memref<8xf32, #tpu.memory_space<smem>>
    %111 = vector.broadcast %110 : f32 to vector<1x256xf32>
    %112 = arith.addf %109, %111 : vector<1x256xf32>
    %c0_89 = arith.constant 0 : index
    %c3_90 = arith.constant 3 : index
    %c0_91 = arith.constant 0 : index
    %113 = vector.load %arg5[%c0_89, %c3_90, %c0_91] : memref<1x8x256xf32, #tpu.memory_space<vmem>>, vector<1x1x256xf32>
    %114 = vector.shape_cast %113 : vector<1x1x256xf32> to vector<1x256xf32>
    %115 = vector.shape_cast %112 : vector<1x256xf32> to vector<1x1x256xf32>
    tpu.vector_store %arg5[%c0_89, %c3_90, %c0_91], %115 {strides = array<i32>} : memref<1x8x256xf32, #tpu.memory_space<vmem>>, vector<1x1x256xf32>,
    %c0_92 = arith.constant 0 : index
    %c0_93 = arith.constant 0 : index
    %c0_94 = arith.constant 0 : index
    %116 = vector.load %arg2[%c0_92, %c0_93, %c0_94] : memref<1x4x256xf32, #tpu.memory_space<vmem>>, vector<1x1x256xf32>
    %117 = vector.shape_cast %116 : vector<1x1x256xf32> to vector<1x256xf32>
    %c4 = arith.constant 4 : index
    %c0_95 = arith.constant 0 : index
    %118 = memref.load %arg3[%c4, %c0_95] : memref<8x4xf32, #tpu.memory_space<smem>>
    %119 = vector.broadcast %118 : f32 to vector<1x256xf32>
    %120 = arith.mulf %117, %119 : vector<1x256xf32>
    %c0_96 = arith.constant 0 : index
    %c1_97 = arith.constant 1 : index
    %c0_98 = arith.constant 0 : index
    %121 = vector.load %arg2[%c0_96, %c1_97, %c0_98] : memref<1x4x256xf32, #tpu.memory_space<vmem>>, vector<1x1x256xf32>
    %122 = vector.shape_cast %121 : vector<1x1x256xf32> to vector<1x256xf32>
    %c4_99 = arith.constant 4 : index
    %c1_100 = arith.constant 1 : index
    %123 = memref.load %arg3[%c4_99, %c1_100] : memref<8x4xf32, #tpu.memory_space<smem>>
    %124 = vector.broadcast %123 : f32 to vector<1x256xf32>
    %125 = arith.mulf %122, %124 : vector<1x256xf32>
    %126 = arith.addf %120, %125 : vector<1x256xf32>
    %c0_101 = arith.constant 0 : index
    %c2_102 = arith.constant 2 : index
    %c0_103 = arith.constant 0 : index
    %127 = vector.load %arg2[%c0_101, %c2_102, %c0_103] : memref<1x4x256xf32, #tpu.memory_space<vmem>>, vector<1x1x256xf32>
    %128 = vector.shape_cast %127 : vector<1x1x256xf32> to vector<1x256xf32>
    %c4_104 = arith.constant 4 : index
    %c2_105 = arith.constant 2 : index
    %129 = memref.load %arg3[%c4_104, %c2_105] : memref<8x4xf32, #tpu.memory_space<smem>>
    %130 = vector.broadcast %129 : f32 to vector<1x256xf32>
    %131 = arith.mulf %128, %130 : vector<1x256xf32>
    %132 = arith.addf %126, %131 : vector<1x256xf32>
    %c0_106 = arith.constant 0 : index
    %c3_107 = arith.constant 3 : index
    %c0_108 = arith.constant 0 : index
    %133 = vector.load %arg2[%c0_106, %c3_107, %c0_108] : memref<1x4x256xf32, #tpu.memory_space<vmem>>, vector<1x1x256xf32>
    %134 = vector.shape_cast %133 : vector<1x1x256xf32> to vector<1x256xf32>
    %c4_109 = arith.constant 4 : index
    %c3_110 = arith.constant 3 : index
    %135 = memref.load %arg3[%c4_109, %c3_110] : memref<8x4xf32, #tpu.memory_space<smem>>
    %136 = vector.broadcast %135 : f32 to vector<1x256xf32>
    %137 = arith.mulf %134, %136 : vector<1x256xf32>
    %138 = arith.addf %132, %137 : vector<1x256xf32>
    %c4_111 = arith.constant 4 : index
    %139 = memref.load %arg4[%c4_111] : memref<8xf32, #tpu.memory_space<smem>>
    %140 = vector.broadcast %139 : f32 to vector<1x256xf32>
    %141 = arith.addf %138, %140 : vector<1x256xf32>
    %c0_112 = arith.constant 0 : index
    %c4_113 = arith.constant 4 : index
    %c0_114 = arith.constant 0 : index
    %142 = vector.load %arg5[%c0_112, %c4_113, %c0_114] : memref<1x8x256xf32, #tpu.memory_space<vmem>>, vector<1x1x256xf32>
    %143 = vector.shape_cast %142 : vector<1x1x256xf32> to vector<1x256xf32>
    %144 = vector.shape_cast %141 : vector<1x256xf32> to vector<1x1x256xf32>
    tpu.vector_store %arg5[%c0_112, %c4_113, %c0_114], %144 {strides = array<i32>} : memref<1x8x256xf32, #tpu.memory_space<vmem>>, vector<1x1x256xf32>,
    %c0_115 = arith.constant 0 : index
    %c0_116 = arith.constant 0 : index
    %c0_117 = arith.constant 0 : index
    %145 = vector.load %arg2[%c0_115, %c0_116, %c0_117] : memref<1x4x256xf32, #tpu.memory_space<vmem>>, vector<1x1x256xf32>
    %146 = vector.shape_cast %145 : vector<1x1x256xf32> to vector<1x256xf32>
    %c5 = arith.constant 5 : index
    %c0_118 = arith.constant 0 : index
    %147 = memref.load %arg3[%c5, %c0_118] : memref<8x4xf32, #tpu.memory_space<smem>>
    %148 = vector.broadcast %147 : f32 to vector<1x256xf32>
    %149 = arith.mulf %146, %148 : vector<1x256xf32>
    %c0_119 = arith.constant 0 : index
    %c1_120 = arith.constant 1 : index
    %c0_121 = arith.constant 0 : index
    %150 = vector.load %arg2[%c0_119, %c1_120, %c0_121] : memref<1x4x256xf32, #tpu.memory_space<vmem>>, vector<1x1x256xf32>
    %151 = vector.shape_cast %150 : vector<1x1x256xf32> to vector<1x256xf32>
    %c5_122 = arith.constant 5 : index
    %c1_123 = arith.constant 1 : index
    %152 = memref.load %arg3[%c5_122, %c1_123] : memref<8x4xf32, #tpu.memory_space<smem>>
    %153 = vector.broadcast %152 : f32 to vector<1x256xf32>
    %154 = arith.mulf %151, %153 : vector<1x256xf32>
    %155 = arith.addf %149, %154 : vector<1x256xf32>
    %c0_124 = arith.constant 0 : index
    %c2_125 = arith.constant 2 : index
    %c0_126 = arith.constant 0 : index
    %156 = vector.load %arg2[%c0_124, %c2_125, %c0_126] : memref<1x4x256xf32, #tpu.memory_space<vmem>>, vector<1x1x256xf32>
    %157 = vector.shape_cast %156 : vector<1x1x256xf32> to vector<1x256xf32>
    %c5_127 = arith.constant 5 : index
    %c2_128 = arith.constant 2 : index
    %158 = memref.load %arg3[%c5_127, %c2_128] : memref<8x4xf32, #tpu.memory_space<smem>>
    %159 = vector.broadcast %158 : f32 to vector<1x256xf32>
    %160 = arith.mulf %157, %159 : vector<1x256xf32>
    %161 = arith.addf %155, %160 : vector<1x256xf32>
    %c0_129 = arith.constant 0 : index
    %c3_130 = arith.constant 3 : index
    %c0_131 = arith.constant 0 : index
    %162 = vector.load %arg2[%c0_129, %c3_130, %c0_131] : memref<1x4x256xf32, #tpu.memory_space<vmem>>, vector<1x1x256xf32>
    %163 = vector.shape_cast %162 : vector<1x1x256xf32> to vector<1x256xf32>
    %c5_132 = arith.constant 5 : index
    %c3_133 = arith.constant 3 : index
    %164 = memref.load %arg3[%c5_132, %c3_133] : memref<8x4xf32, #tpu.memory_space<smem>>
    %165 = vector.broadcast %164 : f32 to vector<1x256xf32>
    %166 = arith.mulf %163, %165 : vector<1x256xf32>
    %167 = arith.addf %161, %166 : vector<1x256xf32>
    %c5_134 = arith.constant 5 : index
    %168 = memref.load %arg4[%c5_134] : memref<8xf32, #tpu.memory_space<smem>>
    %169 = vector.broadcast %168 : f32 to vector<1x256xf32>
    %170 = arith.addf %167, %169 : vector<1x256xf32>
    %c0_135 = arith.constant 0 : index
    %c5_136 = arith.constant 5 : index
    %c0_137 = arith.constant 0 : index
    %171 = vector.load %arg5[%c0_135, %c5_136, %c0_137] : memref<1x8x256xf32, #tpu.memory_space<vmem>>, vector<1x1x256xf32>
    %172 = vector.shape_cast %171 : vector<1x1x256xf32> to vector<1x256xf32>
    %173 = vector.shape_cast %170 : vector<1x256xf32> to vector<1x1x256xf32>
    tpu.vector_store %arg5[%c0_135, %c5_136, %c0_137], %173 {strides = array<i32>} : memref<1x8x256xf32, #tpu.memory_space<vmem>>, vector<1x1x256xf32>,
    %c0_138 = arith.constant 0 : index
    %c0_139 = arith.constant 0 : index
    %c0_140 = arith.constant 0 : index
    %174 = vector.load %arg2[%c0_138, %c0_139, %c0_140] : memref<1x4x256xf32, #tpu.memory_space<vmem>>, vector<1x1x256xf32>
    %175 = vector.shape_cast %174 : vector<1x1x256xf32> to vector<1x256xf32>
    %c6 = arith.constant 6 : index
    %c0_141 = arith.constant 0 : index
    %176 = memref.load %arg3[%c6, %c0_141] : memref<8x4xf32, #tpu.memory_space<smem>>
    %177 = vector.broadcast %176 : f32 to vector<1x256xf32>
    %178 = arith.mulf %175, %177 : vector<1x256xf32>
    %c0_142 = arith.constant 0 : index
    %c1_143 = arith.constant 1 : index
    %c0_144 = arith.constant 0 : index
    %179 = vector.load %arg2[%c0_142, %c1_143, %c0_144] : memref<1x4x256xf32, #tpu.memory_space<vmem>>, vector<1x1x256xf32>
    %180 = vector.shape_cast %179 : vector<1x1x256xf32> to vector<1x256xf32>
    %c6_145 = arith.constant 6 : index
    %c1_146 = arith.constant 1 : index
    %181 = memref.load %arg3[%c6_145, %c1_146] : memref<8x4xf32, #tpu.memory_space<smem>>
    %182 = vector.broadcast %181 : f32 to vector<1x256xf32>
    %183 = arith.mulf %180, %182 : vector<1x256xf32>
    %184 = arith.addf %178, %183 : vector<1x256xf32>
    %c0_147 = arith.constant 0 : index
    %c2_148 = arith.constant 2 : index
    %c0_149 = arith.constant 0 : index
    %185 = vector.load %arg2[%c0_147, %c2_148, %c0_149] : memref<1x4x256xf32, #tpu.memory_space<vmem>>, vector<1x1x256xf32>
    %186 = vector.shape_cast %185 : vector<1x1x256xf32> to vector<1x256xf32>
    %c6_150 = arith.constant 6 : index
    %c2_151 = arith.constant 2 : index
    %187 = memref.load %arg3[%c6_150, %c2_151] : memref<8x4xf32, #tpu.memory_space<smem>>
    %188 = vector.broadcast %187 : f32 to vector<1x256xf32>
    %189 = arith.mulf %186, %188 : vector<1x256xf32>
    %190 = arith.addf %184, %189 : vector<1x256xf32>
    %c0_152 = arith.constant 0 : index
    %c3_153 = arith.constant 3 : index
    %c0_154 = arith.constant 0 : index
    %191 = vector.load %arg2[%c0_152, %c3_153, %c0_154] : memref<1x4x256xf32, #tpu.memory_space<vmem>>, vector<1x1x256xf32>
    %192 = vector.shape_cast %191 : vector<1x1x256xf32> to vector<1x256xf32>
    %c6_155 = arith.constant 6 : index
    %c3_156 = arith.constant 3 : index
    %193 = memref.load %arg3[%c6_155, %c3_156] : memref<8x4xf32, #tpu.memory_space<smem>>
    %194 = vector.broadcast %193 : f32 to vector<1x256xf32>
    %195 = arith.mulf %192, %194 : vector<1x256xf32>
    %196 = arith.addf %190, %195 : vector<1x256xf32>
    %c6_157 = arith.constant 6 : index
    %197 = memref.load %arg4[%c6_157] : memref<8xf32, #tpu.memory_space<smem>>
    %198 = vector.broadcast %197 : f32 to vector<1x256xf32>
    %199 = arith.addf %196, %198 : vector<1x256xf32>
    %c0_158 = arith.constant 0 : index
    %c6_159 = arith.constant 6 : index
    %c0_160 = arith.constant 0 : index
    %200 = vector.load %arg5[%c0_158, %c6_159, %c0_160] : memref<1x8x256xf32, #tpu.memory_space<vmem>>, vector<1x1x256xf32>
    %201 = vector.shape_cast %200 : vector<1x1x256xf32> to vector<1x256xf32>
    %202 = vector.shape_cast %199 : vector<1x256xf32> to vector<1x1x256xf32>
    tpu.vector_store %arg5[%c0_158, %c6_159, %c0_160], %202 {strides = array<i32>} : memref<1x8x256xf32, #tpu.memory_space<vmem>>, vector<1x1x256xf32>,
    %c0_161 = arith.constant 0 : index
    %c0_162 = arith.constant 0 : index
    %c0_163 = arith.constant 0 : index
    %203 = vector.load %arg2[%c0_161, %c0_162, %c0_163] : memref<1x4x256xf32, #tpu.memory_space<vmem>>, vector<1x1x256xf32>
    %204 = vector.shape_cast %203 : vector<1x1x256xf32> to vector<1x256xf32>
    %c7 = arith.constant 7 : index
    %c0_164 = arith.constant 0 : index
    %205 = memref.load %arg3[%c7, %c0_164] : memref<8x4xf32, #tpu.memory_space<smem>>
    %206 = vector.broadcast %205 : f32 to vector<1x256xf32>
    %207 = arith.mulf %204, %206 : vector<1x256xf32>
    %c0_165 = arith.constant 0 : index
    %c1_166 = arith.constant 1 : index
    %c0_167 = arith.constant 0 : index
    %208 = vector.load %arg2[%c0_165, %c1_166, %c0_167] : memref<1x4x256xf32, #tpu.memory_space<vmem>>, vector<1x1x256xf32>
    %209 = vector.shape_cast %208 : vector<1x1x256xf32> to vector<1x256xf32>
    %c7_168 = arith.constant 7 : index
    %c1_169 = arith.constant 1 : index
    %210 = memref.load %arg3[%c7_168, %c1_169] : memref<8x4xf32, #tpu.memory_space<smem>>
    %211 = vector.broadcast %210 : f32 to vector<1x256xf32>
    %212 = arith.mulf %209, %211 : vector<1x256xf32>
    %213 = arith.addf %207, %212 : vector<1x256xf32>
    %c0_170 = arith.constant 0 : index
    %c2_171 = arith.constant 2 : index
    %c0_172 = arith.constant 0 : index
    %214 = vector.load %arg2[%c0_170, %c2_171, %c0_172] : memref<1x4x256xf32, #tpu.memory_space<vmem>>, vector<1x1x256xf32>
    %215 = vector.shape_cast %214 : vector<1x1x256xf32> to vector<1x256xf32>
    %c7_173 = arith.constant 7 : index
    %c2_174 = arith.constant 2 : index
    %216 = memref.load %arg3[%c7_173, %c2_174] : memref<8x4xf32, #tpu.memory_space<smem>>
    %217 = vector.broadcast %216 : f32 to vector<1x256xf32>
    %218 = arith.mulf %215, %217 : vector<1x256xf32>
    %219 = arith.addf %213, %218 : vector<1x256xf32>
    %c0_175 = arith.constant 0 : index
    %c3_176 = arith.constant 3 : index
    %c0_177 = arith.constant 0 : index
    %220 = vector.load %arg2[%c0_175, %c3_176, %c0_177] : memref<1x4x256xf32, #tpu.memory_space<vmem>>, vector<1x1x256xf32>
    %221 = vector.shape_cast %220 : vector<1x1x256xf32> to vector<1x256xf32>
    %c7_178 = arith.constant 7 : index
    %c3_179 = arith.constant 3 : index
    %222 = memref.load %arg3[%c7_178, %c3_179] : memref<8x4xf32, #tpu.memory_space<smem>>
    %223 = vector.broadcast %222 : f32 to vector<1x256xf32>
    %224 = arith.mulf %221, %223 : vector<1x256xf32>
    %225 = arith.addf %219, %224 : vector<1x256xf32>
    %c7_180 = arith.constant 7 : index
    %226 = memref.load %arg4[%c7_180] : memref<8xf32, #tpu.memory_space<smem>>
    %227 = vector.broadcast %226 : f32 to vector<1x256xf32>
    %228 = arith.addf %225, %227 : vector<1x256xf32>
    %c0_181 = arith.constant 0 : index
    %c7_182 = arith.constant 7 : index
    %c0_183 = arith.constant 0 : index
    %229 = vector.load %arg5[%c0_181, %c7_182, %c0_183] : memref<1x8x256xf32, #tpu.memory_space<vmem>>, vector<1x1x256xf32>
    %230 = vector.shape_cast %229 : vector<1x1x256xf32> to vector<1x256xf32>
    %231 = vector.shape_cast %228 : vector<1x256xf32> to vector<1x1x256xf32>
    tpu.vector_store %arg5[%c0_181, %c7_182, %c0_183], %231 {strides = array<i32>} : memref<1x8x256xf32, #tpu.memory_space<vmem>>, vector<1x1x256xf32>,
    return
  }
  func.func @transform_0(%arg0: i32, %arg1: i32) -> (i32, i32, i32) {
    %c0_i32 = arith.constant 0 : i32
    %c0_i32_0 = arith.constant 0 : i32
    return %arg0, %c0_i32, %arg1 : i32, i32, i32
  }
  func.func @transform_1(%arg0: i32, %arg1: i32) -> (i32, i32) {
    %c0_i32 = arith.constant 0 : i32
    %c0_i32_0 = arith.constant 0 : i32
    %c0_i32_1 = arith.constant 0 : i32
    return %c0_i32, %c0_i32_0 : i32, i32
  }
  func.func @transform_2(%arg0: i32, %arg1: i32) -> i32 {
    %c0_i32 = arith.constant 0 : i32
    %c0_i32_0 = arith.constant 0 : i32
    return %c0_i32 : i32
  }
  func.func @transform_3(%arg0: i32, %arg1: i32) -> (i32, i32, i32) {
    %c0_i32 = arith.constant 0 : i32
    %c0_i32_0 = arith.constant 0 : i32
    return %arg0, %c0_i32, %arg1 : i32, i32, i32
  }
}

</mosaic_0001>

<llo_original>
// kernel: tpu_custom_call.1
$region0: #{tpu_custom_call.1}
  #allocation0 [shape = 'u32[]', space=smem, size = 0x4, offset = 0x4, fixed_abs, tag = 'smem constant byte address 0x4 - core index']
  #allocation1 [shape = 'u32[144,128]{1,0:T(1,128)}', space=vmem, size = 0x12000, scoped, tag = 'internal scratch']
  %s0 = inlined_call_operand.hbm [shape: f32[2,4,256], index: 0, kind: input, shape index: {}]
  %s1 = inlined_call_operand.vmem [shape: f32[8,4], index: 1, kind: input, shape index: {}]
  %s2 = inlined_call_operand.vmem [shape: f32[8], index: 2, kind: input, shape index: {}]
  %s3 = inlined_call_operand.hbm [shape: f32[2,8,256], index: 3, kind: output, shape index: {}]
  %s4 = sld [smem:[#allocation0]]
  $region57: #{tpu_custom_call.1} parent=0
    _
  %s6 = ssub.s32 1, %s4
  %s7 = scalar_select 0, %s6, %s4
  $region1: #{tpu_custom_call.1} parent=0
    #allocation2 [shape = 'u8[8192]{0}', space=vmem, size = 0x2000, scoped, tag = 'input window, operand 0']
    #allocation3 [shape = 's32[2]{0}', space=sflag, size = 0x8, scoped, tag = 'scoped memory for tpu_custom_call.1']
    #allocation4 [shape = 's32[2]{0}', space=sflag, size = 0x8, scoped, tag = 'scoped memory for tpu_custom_call.1']
    #allocation5 [shape = 's32[2]{0}', space=sflag, size = 0x8, scoped, tag = 'scoped memory for tpu_custom_call.1']
    #allocation6 [shape = 'u8[4096]{0}', space=smem, size = 0x1000, scoped, tag = 'input window, operand 1, single buffered']
    #allocation7 [shape = 'u8[512]{0}', space=smem, size = 0x200, scoped, tag = 'input window, operand 2, single buffered']
    #allocation8 [shape = 's32[1]{0}', space=sflag, size = 0x4, scoped, tag = 'scoped memory for tpu_custom_call.1']
    #allocation9 [shape = 'u8[16384]{0}', space=vmem, size = 0x4000, scoped, tag = 'output window, operand 0']
    %8 = vsyncpa [#allocation3], 0
    %s9 = scalar_lea.sflag [#allocation3], 1
    %10 = vsyncpa %s9, 0
    %11 = vsyncpa [#allocation5], 0
    %12 = vsyncpa [#allocation8], 0
    %13 = vsyncpa [#allocation4], 0
    %s14 = scalar_lea.sflag [#allocation4], 1
    %15 = vsyncpa %s14, 0
    loop: start=0, step=1, limit=4
    $region2: #{tpu_custom_call.1} parent=1 // loop_pre_header
      _
    $region3: #{tpu_custom_call.1} parent=1 // loop_header
      %s17 = sphi 0, %s21
      %p18 = scmp.ge.s32.totalorder %s17, 4
      %s24 = sphi 0, %s36
      %s25 = sphi 0, %s32
      %s26 = sphi 0, %s24
      %s27 = sphi 0, %s25
      %s28 = sphi 0, %s26
      %s29 = sphi 0, %s27
      %s41 = sphi 0, %s43
      %s44 = sphi 0, %s41
      %s45 = sphi 0, %s44
      %s61 = sphi 0, %s45
      %s65 = sphi 0, %s65
      %s67 = sphi 0, %s65
      %s68 = sphi 0, %s67
      %s82 = sphi 0, %s68
      %s86 = sphi 0, %s86
      %s88 = sphi 0, %s86
      %s89 = sphi 0, %s88
      %s103 = sphi 0, %s89
      %s111 = sphi 0, %s113
      %s114 = sphi 0, %s111
      %s115 = sphi 0, %s114
      %s131 = sphi 0, %s115
    $region4: #{tpu_custom_call.1} parent=1 // loop_header_branch
      %20 = sbr.rel (%p18) target = $region8
    $region5: #{tpu_custom_call.1} parent=1 // loop_body
      %s22 = ssub.s32 %s17, 1
      %s23 = ssub.s32 %s17, 2
      %s30 = sadd.s32 1, %s25
      %p31 = scmp.ge.s32.totalorder %s30, 1
      %s32 = scalar_select %p31, 0, %s30
      %s33 = sadd.s32 1, %s24
      %s34 = scalar_select %p31, %s33, %s24
      %p35 = scmp.ge.s32.totalorder %s34, 2
      %s36 = scalar_select %p35, 0, %s34
      %s37 = ssub.s32 %s24, %s36
      %s38 = ssub.s32 %s25, %s32
      %s39 = sor.u32 %s37, %s38
      %p40 = scmp.eq.s32.totalorder %s39, 0
      %s42 = sadd.s32 %s41, 1
      %s43 = scalar_select %p40, %s41, %s42
      %p46 = pneg %p40
      %p47 = scmp.eq.s32.totalorder %s17, 1
      %p48 = por %p46, %p47
      %p49 = scmp.ne.s32.totalorder %s41, %s44
      %p50 = scmp.eq.s32.totalorder %s17, 0
      %p51 = por %p49, %p50
      %p52 = scmp.ne.s32.totalorder %s41, %s44
      %p53 = scmp.eq.s32.totalorder %s22, 1
      %p54 = por %p52, %p53
      %p55 = scmp.ne.s32.totalorder %s44, %s45
      %p56 = scmp.eq.s32.totalorder %s22, 0
      %p57 = por %p55, %p56
      %p58 = scmp.ne.s32.totalorder %s44, %s45
      %p59 = scmp.eq.s32.totalorder %s23, 1
      %p60 = por %p58, %p59
      %p62 = scmp.ne.s32.totalorder %s45, %s61
      %p63 = scmp.eq.s32.totalorder %s23, 0
      %p64 = por %p62, %p63
      %s66 = sadd.s32 %s65, 1
      %p69 = scmp.eq.s32.totalorder %s17, 1
      %p70 = scmp.ne.s32.totalorder %s65, %s67
      %p71 = scmp.eq.s32.totalorder %s17, 0
      %p72 = por %p70, %p71
      %p73 = scmp.ne.s32.totalorder %s65, %s67
      %p74 = scmp.eq.s32.totalorder %s22, 1
      %p75 = por %p73, %p74
      %p76 = scmp.ne.s32.totalorder %s67, %s68
      %p77 = scmp.eq.s32.totalorder %s22, 0
      %p78 = por %p76, %p77
      %p79 = scmp.ne.s32.totalorder %s67, %s68
      %p80 = scmp.eq.s32.totalorder %s23, 1
      %p81 = por %p79, %p80
      %p83 = scmp.ne.s32.totalorder %s68, %s82
      %p84 = scmp.eq.s32.totalorder %s23, 0
      %p85 = por %p83, %p84
      %s87 = sadd.s32 %s86, 1
      %p90 = scmp.eq.s32.totalorder %s17, 1
      %p91 = scmp.ne.s32.totalorder %s86, %s88
      %p92 = scmp.eq.s32.totalorder %s17, 0
      %p93 = por %p91, %p92
      %p94 = scmp.ne.s32.totalorder %s86, %s88
      %p95 = scmp.eq.s32.totalorder %s22, 1
      %p96 = por %p94, %p95
      %p97 = scmp.ne.s32.totalorder %s88, %s89
      %p98 = scmp.eq.s32.totalorder %s22, 0
      %p99 = por %p97, %p98
      %p100 = scmp.ne.s32.totalorder %s88, %s89
      %p101 = scmp.eq.s32.totalorder %s23, 1
      %p102 = por %p100, %p101
      %p104 = scmp.ne.s32.totalorder %s89, %s103
      %p105 = scmp.eq.s32.totalorder %s23, 0
      %p106 = por %p104, %p105
      %s107 = ssub.s32 %s24, %s36
      %s108 = ssub.s32 %s25, %s32
      %s109 = sor.u32 %s107, %s108
      %p110 = scmp.eq.s32.totalorder %s109, 0
      %s112 = sadd.s32 %s111, 1
      %s113 = scalar_select %p110, %s111, %s112
      %p116 = pneg %p110
      %p117 = scmp.eq.s32.totalorder %s17, 1
      %p118 = por %p116, %p117
      %p119 = scmp.ne.s32.totalorder %s111, %s114
      %p120 = scmp.eq.s32.totalorder %s17, 0
      %p121 = por %p119, %p120
      %p122 = scmp.ne.s32.totalorder %s111, %s114
      %p123 = scmp.eq.s32.totalorder %s22, 1
      %p124 = por %p122, %p123
      %p125 = scmp.ne.s32.totalorder %s114, %s115
      %p126 = scmp.eq.s32.totalorder %s22, 0
      %p127 = por %p125, %p126
      %p128 = scmp.ne.s32.totalorder %s114, %s115
      %p129 = scmp.eq.s32.totalorder %s23, 1
      %p130 = por %p128, %p129
      %p132 = scmp.ne.s32.totalorder %s115, %s131
      %p133 = scmp.eq.s32.totalorder %s23, 0
      %p134 = por %p132, %p133
      %p135 = scmp.le.s32.totalorder 1, %s17
      %p136 = scmp.lt.s32.totalorder %s17, 3
      %p137 = pnand %p135, %p136
      %p138 = pneg %p137
      // Predicated region
      $region9: #{tpu_custom_call.1} parent=5 // pred_check
        _
      $region10: #{tpu_custom_call.1} parent=5 // pred_check_branch
        %140 = sbr.rel (%p137) target = $region12
      $region11: #{tpu_custom_call.1} parent=5 // pred_region
        %s141 = ssub.s32 %s17, 1
        // Predicated region
        $region13: #{tpu_custom_call.1} parent=11 // pred_check
          %p142 = pneg %p78
        $region14: #{tpu_custom_call.1} parent=11 // pred_check_branch
          %144 = sbr.rel (%p142) target = $region16
        $region15: #{tpu_custom_call.1} parent=11 // pred_region
          %s146 = ssub.s32 128, 128
          %147 = vsyncadd [#allocation5], %s146
          %s149 = sshll.u32 %s1, 4
          %s150 = int_to_ptr.vmem [resolvable:$true] %s149
          %152 = dma.vmem_to_smem %s150, 128, [#allocation6], [#allocation5]
        $region16: #{tpu_custom_call.1} parent=11 // pred_fallthru
          _
        // Predicated region
        $region17: #{tpu_custom_call.1} parent=11 // pred_check
          %p153 = pneg %p99
        $region18: #{tpu_custom_call.1} parent=11 // pred_check_branch
          %155 = sbr.rel (%p153) target = $region20
        $region19: #{tpu_custom_call.1} parent=11 // pred_region
          %s157 = ssub.s32 16, 16
          %158 = vsyncadd [#allocation8], %s157
          %s160 = sshll.u32 %s2, 4
          %s161 = int_to_ptr.vmem [resolvable:$true] %s160
          %163 = dma.vmem_to_smem %s161, 16, [#allocation7], [#allocation8]
        $region20: #{tpu_custom_call.1} parent=11 // pred_fallthru
          _
      $region12: #{tpu_custom_call.1} parent=5 // pred_fallthru
        _
      %p164 = scmp.lt.s32.totalorder %s17, 2
      // Predicated region
      $region21: #{tpu_custom_call.1} parent=5 // pred_check
        %p165 = pneg %p164
      $region22: #{tpu_custom_call.1} parent=5 // pred_check_branch
        %167 = sbr.rel (%p165) target = $region24
      $region23: #{tpu_custom_call.1} parent=5 // pred_region
        // Predicated region
        $region25: #{tpu_custom_call.1} parent=23 // pred_check
          %p168 = pneg %p51
        $region26: #{tpu_custom_call.1} parent=23 // pred_check_branch
          %170 = sbr.rel (%p168) target = $region28
        $region27: #{tpu_custom_call.1} parent=23 // pred_region
          %s171 = sand.u32 %s41, 1
          %s172 = scalar_lea.sflag [#allocation3], %s171
          %s173 = sand.u32 %s41, 1
          %s174 = smul.addr %s173, 8
          %s175 = scalar_lea.vmem [#allocation2], %s174
          %s176 = smul.u32 2, %s25
          %s178 = ssub.s32 128, 128
          %179 = vsyncadd %s172, %s178
          %s180 = smul.addr %s24, 2
          %s181 = sadd.s32 %s176, %s180
          %s182 = smul.addr %s181, 64
          %s183 = scalar_lea.hbm %s0, %s182
          %s185 = sshll.u32 %s175, 4
          %s186 = int_to_ptr.vmem [resolvable:$true] %s185
          %188 = dma.hbm_to_vmem [thread:$0]  %s183, 128, %s186, %s172
        $region28: #{tpu_custom_call.1} parent=23 // pred_fallthru
          _
      $region24: #{tpu_custom_call.1} parent=5 // pred_fallthru
        _
      %p189 = scmp.le.s32.totalorder 1, %s17
      %p190 = scmp.lt.s32.totalorder %s17, 3
      %p191 = pnand %p189, %p190
      %p192 = pneg %p191
      // Predicated region
      $region29: #{tpu_custom_call.1} parent=5 // pred_check
        _
      $region30: #{tpu_custom_call.1} parent=5 // pred_check_branch
        %194 = sbr.rel (%p191) target = $region32
      $region31: #{tpu_custom_call.1} parent=5 // pred_region
        %s195 = ssub.s32 %s17, 1
        %s196 = sand.u32 %s44, 1
        %s197 = scalar_lea.sflag [#allocation3], %s196
        %s198 = sand.u32 %s44, 1
        %s199 = smul.addr %s198, 8
        %s200 = scalar_lea.vmem [#allocation2], %s199
        // Predicated region
        $region33: #{tpu_custom_call.1} parent=31 // pred_check
          %p201 = pneg %p57
        $region34: #{tpu_custom_call.1} parent=31 // pred_check_branch
          %203 = sbr.rel (%p201) target = $region36
        $region35: #{tpu_custom_call.1} parent=31 // pred_region
          %204 = dma.done %s197, 128
        $region36: #{tpu_custom_call.1} parent=31 // pred_fallthru
          _
        // Predicated region
        $region37: #{tpu_custom_call.1} parent=31 // pred_check
          %p205 = pneg %p78
        $region38: #{tpu_custom_call.1} parent=31 // pred_check_branch
          %207 = sbr.rel (%p205) target = $region40
        $region39: #{tpu_custom_call.1} parent=31 // pred_region
          %208 = dma.done [#allocation5], 128
        $region40: #{tpu_custom_call.1} parent=31 // pred_fallthru
          _
        // Predicated region
        $region41: #{tpu_custom_call.1} parent=31 // pred_check
          %p209 = pneg %p99
        $region42: #{tpu_custom_call.1} parent=31 // pred_check_branch
          %211 = sbr.rel (%p209) target = $region44
        $region43: #{tpu_custom_call.1} parent=31 // pred_region
          %212 = dma.done [#allocation8], 16
        $region44: #{tpu_custom_call.1} parent=31 // pred_fallthru
          _
        %213 = sfence
        %s214 = sand.u32 %s44, 1
        %s215 = scalar_lea.sflag [#allocation3], %s214
        %s216 = sand.u32 %s44, 1
        %s217 = smul.addr %s216, 8
        %s218 = scalar_lea.vmem [#allocation2], %s217
        %p219 = pneg %p57
        %p220 = pneg %p54
        %p221 = pneg %p78
        %p222 = pneg %p75
        %p223 = pneg %p99
        %p224 = pneg %p96
        %p225 = pneg %p127
        %p226 = pneg %p124
        %s227 = sand.u32 %s114, 1
        %s228 = scalar_lea.sflag [#allocation4], %s227
        %s229 = sand.u32 %s114, 1
        %s230 = smul.addr %s229, 16
        %s231 = scalar_lea.vmem [#allocation9], %s230
        %s232 = smul.u32 2, %s27
        %s233 = smul.u32 2, %s27
        %v234 = vld [vmem:[%s200] ss:$4 sm:$0x3]
        %s235 = sld [smem:[#allocation6]]
        %v236 = vstv %s235
        %v237 = vmul.f32 %v234, %v236
        %s238 = scalar_lea.vmem %s200, 1 [#allocation2]
        %v239 = vld [vmem:[%s238] ss:$4 sm:$0x3]
        %s240 = sld [smem:[#allocation6 + $0x1]]
        %v241 = vstv %s240
        %v242 = vmul.f32 %v239, %v241
        %v243 = vadd.f32 %v237, %v242
        %s244 = scalar_lea.vmem %s200, 2 [#allocation2]
        %v245 = vld [vmem:[%s244] ss:$4 sm:$0x3]
        %s246 = sld [smem:[#allocation6 + $0x2]]
        %v247 = vstv %s246
        %v248 = vmul.f32 %v245, %v247
        %v249 = vadd.f32 %v243, %v248
        %s250 = scalar_lea.vmem %s200, 3 [#allocation2]
        %v251 = vld [vmem:[%s250] ss:$4 sm:$0x3]
        %s252 = sld [smem:[#allocation6 + $0x3]]
        %v253 = vstv %s252
        %v254 = vmul.f32 %v251, %v253
        %v255 = vadd.f32 %v249, %v254
        %s256 = sld [smem:[#allocation7]]
        %v257 = vstv %s256
        %v258 = vadd.f32 %v255, %v257
        %v259 = vlaneseq
        %vm260 = vcmp.ge.s32.totalorder %v259, 0
        %vm261 = vcmp.lt.s32.totalorder %v259, 256
        %vm262 = vmand %vm260, %vm261
        %263 = vst.msk [vmem:[%s231] ss:$8 sm:$0x3] %vm262, %v258
        %264 = vst.msk [vmem:[%s231] ss:$8 sm:$0x0] %vm262, %v258
        %v265 = vld [vmem:[%s200] ss:$4 sm:$0x3]
        %s266 = sld [smem:[#allocation6 + $0x80]]
        %v267 = vstv %s266
        %v268 = vmul.f32 %v265, %v267
        %v269 = vld [vmem:[%s238] ss:$4 sm:$0x3]
        %s270 = sld [smem:[#allocation6 + $0x81]]
        %v271 = vstv %s270
        %v272 = vmul.f32 %v269, %v271
        %v273 = vadd.f32 %v268, %v272
        %v274 = vld [vmem:[%s244] ss:$4 sm:$0x3]
        %s275 = sld [smem:[#allocation6 + $0x82]]
        %v276 = vstv %s275
        %v277 = vmul.f32 %v274, %v276
        %v278 = vadd.f32 %v273, %v277
        %v279 = vld [vmem:[%s250] ss:$4 sm:$0x3]
        %s280 = sld [smem:[#allocation6 + $0x83]]
        %v281 = vstv %s280
        %v282 = vmul.f32 %v279, %v281
        %v283 = vadd.f32 %v278, %v282
        %s284 = sld [smem:[#allocation7 + $0x1]]
        %v285 = vstv %s284
        %v286 = vadd.f32 %v283, %v285
        %s287 = scalar_lea.vmem %s231, 1 [#allocation9]
        %288 = vst.msk [vmem:[%s287] ss:$8 sm:$0x3] %vm262, %v286
        %289 = vst.msk [vmem:[%s287] ss:$8 sm:$0x0] %vm262, %v286
        %v290 = vld [vmem:[%s200] ss:$4 sm:$0x3]
        %s291 = sld [smem:[#allocation6 + $0x100]]
        %v292 = vstv %s291
        %v293 = vmul.f32 %v290, %v292
        %v294 = vld [vmem:[%s238] ss:$4 sm:$0x3]
        %s295 = sld [smem:[#allocation6 + $0x101]]
        %v296 = vstv %s295
        %v297 = vmul.f32 %v294, %v296
        %v298 = vadd.f32 %v293, %v297
        %v299 = vld [vmem:[%s244] ss:$4 sm:$0x3]
        %s300 = sld [smem:[#allocation6 + $0x102]]
        %v301 = vstv %s300
        %v302 = vmul.f32 %v299, %v301
        %v303 = vadd.f32 %v298, %v302
        %v304 = vld [vmem:[%s250] ss:$4 sm:$0x3]
        %s305 = sld [smem:[#allocation6 + $0x103]]
        %v306 = vstv %s305
        %v307 = vmul.f32 %v304, %v306
        %v308 = vadd.f32 %v303, %v307
        %s309 = sld [smem:[#allocation7 + $0x2]]
        %v310 = vstv %s309
        %v311 = vadd.f32 %v308, %v310
        %s312 = scalar_lea.vmem %s231, 2 [#allocation9]
        %313 = vst.msk [vmem:[%s312] ss:$8 sm:$0x3] %vm262, %v311
        %314 = vst.msk [vmem:[%s312] ss:$8 sm:$0x0] %vm262, %v311
        %v315 = vld [vmem:[%s200] ss:$4 sm:$0x3]
        %s316 = sld [smem:[#allocation6 + $0x180]]
        %v317 = vstv %s316
        %v318 = vmul.f32 %v315, %v317
        %v319 = vld [vmem:[%s238] ss:$4 sm:$0x3]
        %s320 = sld [smem:[#allocation6 + $0x181]]
        %v321 = vstv %s320
        %v322 = vmul.f32 %v319, %v321
        %v323 = vadd.f32 %v318, %v322
        %v324 = vld [vmem:[%s244] ss:$4 sm:$0x3]
        %s325 = sld [smem:[#allocation6 + $0x182]]
        %v326 = vstv %s325
        %v327 = vmul.f32 %v324, %v326
        %v328 = vadd.f32 %v323, %v327
        %v329 = vld [vmem:[%s250] ss:$4 sm:$0x3]
        %s330 = sld [smem:[#allocation6 + $0x183]]
        %v331 = vstv %s330
        %v332 = vmul.f32 %v329, %v331
        %v333 = vadd.f32 %v328, %v332
        %s334 = sld [smem:[#allocation7 + $0x3]]
        %v335 = vstv %s334
        %v336 = vadd.f32 %v333, %v335
        %s337 = scalar_lea.vmem %s231, 3 [#allocation9]
        %338 = vst.msk [vmem:[%s337] ss:$8 sm:$0x3] %vm262, %v336
        %339 = vst.msk [vmem:[%s337] ss:$8 sm:$0x0] %vm262, %v336
        %v340 = vld [vmem:[%s200] ss:$4 sm:$0x3]
        %s341 = sld [smem:[#allocation6 + $0x200]]
        %v342 = vstv %s341
        %v343 = vmul.f32 %v340, %v342
        %v344 = vld [vmem:[%s238] ss:$4 sm:$0x3]
        %s345 = sld [smem:[#allocation6 + $0x201]]
        %v346 = vstv %s345
        %v347 = vmul.f32 %v344, %v346
        %v348 = vadd.f32 %v343, %v347
        %v349 = vld [vmem:[%s244] ss:$4 sm:$0x3]
        %s350 = sld [smem:[#allocation6 + $0x202]]
        %v351 = vstv %s350
        %v352 = vmul.f32 %v349, %v351
        %v353 = vadd.f32 %v348, %v352
        %v354 = vld [vmem:[%s250] ss:$4 sm:$0x3]
        %s355 = sld [smem:[#allocation6 + $0x203]]
        %v356 = vstv %s355
        %v357 = vmul.f32 %v354, %v356
        %v358 = vadd.f32 %v353, %v357
        %s359 = sld [smem:[#allocation7 + $0x4]]
        %v360 = vstv %s359
        %v361 = vadd.f32 %v358, %v360
        %s362 = scalar_lea.vmem %s231, 4 [#allocation9]
        %363 = vst.msk [vmem:[%s362] ss:$8 sm:$0x3] %vm262, %v361
        %364 = vst.msk [vmem:[%s362] ss:$8 sm:$0x0] %vm262, %v361
        %v365 = vld [vmem:[%s200] ss:$4 sm:$0x3]
        %s366 = sld [smem:[#allocation6 + $0x280]]
        %v367 = vstv %s366
        %v368 = vmul.f32 %v365, %v367
        %v369 = vld [vmem:[%s238] ss:$4 sm:$0x3]
        %s370 = sld [smem:[#allocation6 + $0x281]]
        %v371 = vstv %s370
        %v372 = vmul.f32 %v369, %v371
        %v373 = vadd.f32 %v368, %v372
        %v374 = vld [vmem:[%s244] ss:$4 sm:$0x3]
        %s375 = sld [smem:[#allocation6 + $0x282]]
        %v376 = vstv %s375
        %v377 = vmul.f32 %v374, %v376
        %v378 = vadd.f32 %v373, %v377
        %v379 = vld [vmem:[%s250] ss:$4 sm:$0x3]
        %s380 = sld [smem:[#allocation6 + $0x283]]
        %v381 = vstv %s380
        %v382 = vmul.f32 %v379, %v381
        %v383 = vadd.f32 %v378, %v382
        %s384 = sld [smem:[#allocation7 + $0x5]]
        %v385 = vstv %s384
        %v386 = vadd.f32 %v383, %v385
        %s387 = scalar_lea.vmem %s231, 5 [#allocation9]
        %388 = vst.msk [vmem:[%s387] ss:$8 sm:$0x3] %vm262, %v386
        %389 = vst.msk [vmem:[%s387] ss:$8 sm:$0x0] %vm262, %v386
        %v390 = vld [vmem:[%s200] ss:$4 sm:$0x3]
        %s391 = sld [smem:[#allocation6 + $0x300]]
        %v392 = vstv %s391
        %v393 = vmul.f32 %v390, %v392
        %v394 = vld [vmem:[%s238] ss:$4 sm:$0x3]
        %s395 = sld [smem:[#allocation6 + $0x301]]
        %v396 = vstv %s395
        %v397 = vmul.f32 %v394, %v396
        %v398 = vadd.f32 %v393, %v397
        %v399 = vld [vmem:[%s244] ss:$4 sm:$0x3]
        %s400 = sld [smem:[#allocation6 + $0x302]]
        %v401 = vstv %s400
        %v402 = vmul.f32 %v399, %v401
        %v403 = vadd.f32 %v398, %v402
        %v404 = vld [vmem:[%s250] ss:$4 sm:$0x3]
        %s405 = sld [smem:[#allocation6 + $0x303]]
        %v406 = vstv %s405
        %v407 = vmul.f32 %v404, %v406
        %v408 = vadd.f32 %v403, %v407
        %s409 = sld [smem:[#allocation7 + $0x6]]
        %v410 = vstv %s409
        %v411 = vadd.f32 %v408, %v410
        %s412 = scalar_lea.vmem %s231, 6 [#allocation9]
        %413 = vst.msk [vmem:[%s412] ss:$8 sm:$0x3] %vm262, %v411
        %414 = vst.msk [vmem:[%s412] ss:$8 sm:$0x0] %vm262, %v411
        %v415 = vld [vmem:[%s200] ss:$4 sm:$0x3]
        %s416 = sld [smem:[#allocation6 + $0x380]]
        %v417 = vstv %s416
        %v418 = vmul.f32 %v415, %v417
        %v419 = vld [vmem:[%s238] ss:$4 sm:$0x3]
        %s420 = sld [smem:[#allocation6 + $0x381]]
        %v421 = vstv %s420
        %v422 = vmul.f32 %v419, %v421
        %v423 = vadd.f32 %v418, %v422
        %v424 = vld [vmem:[%s244] ss:$4 sm:$0x3]
        %s425 = sld [smem:[#allocation6 + $0x382]]
        %v426 = vstv %s425
        %v427 = vmul.f32 %v424, %v426
        %v428 = vadd.f32 %v423, %v427
        %v429 = vld [vmem:[%s250] ss:$4 sm:$0x3]
        %s430 = sld [smem:[#allocation6 + $0x383]]
        %v431 = vstv %s430
        %v432 = vmul.f32 %v429, %v431
        %v433 = vadd.f32 %v428, %v432
        %s434 = sld [smem:[#allocation7 + $0x7]]
        %v435 = vstv %s434
        %v436 = vadd.f32 %v433, %v435
        %s437 = scalar_lea.vmem %s231, 7 [#allocation9]
        %438 = vst.msk [vmem:[%s437] ss:$8 sm:$0x3] %vm262, %v436
        %439 = vst.msk [vmem:[%s437] ss:$8 sm:$0x0] %vm262, %v436
        %s440 = sand.u32 %s114, 1
        %s441 = scalar_lea.sflag [#allocation4], %s440
        %s442 = sand.u32 %s114, 1
        %s443 = smul.addr %s442, 16
        %s444 = scalar_lea.vmem [#allocation9], %s443
        // Predicated region
        $region45: #{tpu_custom_call.1} parent=31 // pred_check
          %p445 = pneg %p124
        $region46: #{tpu_custom_call.1} parent=31 // pred_check_branch
          %447 = sbr.rel (%p445) target = $region48
        $region47: #{tpu_custom_call.1} parent=31 // pred_region
          %s448 = smul.u32 2, %s27
          %s450 = ssub.s32 256, 256
          %451 = vsyncadd %s441, %s450
          %s452 = smul.addr %s26, 2
          %s453 = sadd.s32 %s448, %s452
          %s454 = smul.addr %s453, 128
          %s455 = scalar_lea.hbm %s3, %s454
          %s457 = sshll.u32 %s444, 4
          %s458 = int_to_ptr.vmem [resolvable:$true] %s457
          %460 = dma.vmem_to_hbm [thread:$0]  %s458, 256, %s455, %s441
        $region48: #{tpu_custom_call.1} parent=31 // pred_fallthru
          _
      $region32: #{tpu_custom_call.1} parent=5 // pred_fallthru
        _
      %p461 = scmp.le.s32.totalorder 2, %s17
      // Predicated region
      $region49: #{tpu_custom_call.1} parent=5 // pred_check
        %p462 = pneg %p461
      $region50: #{tpu_custom_call.1} parent=5 // pred_check_branch
        %464 = sbr.rel (%p462) target = $region52
      $region51: #{tpu_custom_call.1} parent=5 // pred_region
        %s465 = ssub.s32 %s17, 2
        // Predicated region
        $region53: #{tpu_custom_call.1} parent=51 // pred_check
          %p466 = pneg %p130
        $region54: #{tpu_custom_call.1} parent=51 // pred_check_branch
          %468 = sbr.rel (%p466) target = $region56
        $region55: #{tpu_custom_call.1} parent=51 // pred_region
          %s469 = sand.u32 %s115, 1
          %s470 = scalar_lea.sflag [#allocation4], %s469
          %s471 = sand.u32 %s115, 1
          %s472 = smul.addr %s471, 16
          %s473 = scalar_lea.vmem [#allocation9], %s472
          %474 = dma.done %s470, 256
        $region56: #{tpu_custom_call.1} parent=51 // pred_fallthru
          _
      $region52: #{tpu_custom_call.1} parent=5 // pred_fallthru
        _
    $region6: #{tpu_custom_call.1} parent=1 // loop_footer
      %s21 = sadd.s32 1, %s17
    $region7: #{tpu_custom_call.1} parent=1 // loop_footer_branch
      %16 = sbr.rel target = $region3
    $region8: #{tpu_custom_call.1} parent=1 // loop_exit
      _
    %475 = vsyncpa [#allocation3], 1
    %s476 = scalar_lea.sflag [#allocation3], 1
    %477 = vsyncpa %s476, 1
    %478 = vsyncpa [#allocation4], 1
    %s479 = scalar_lea.sflag [#allocation4], 1
    %480 = vsyncpa %s479, 1
    %481 = vsyncpa [#allocation5], 1
    %s482 = scalar_lea.sflag [#allocation5], 1
    %483 = vsyncpa %s482, 1
    %484 = vsyncpa [#allocation8], 1

</llo_original>
